<compile_context>
chip_gen: v5e
topology: v5e:2x2
jax: 0.10.0
libtpu: 0.0.40
codegen_flags: <defaults>
</compile_context>

<pallas_src>
import jax
import jax.numpy as jnp
from jax.experimental import pallas as pl
from jax.experimental.pallas import tpu as pltpu

_LANES = 128
_NEG_BIG = -1e30  # finite "minus infinity" for padded classes (avoids -inf - -inf NaN)


def _round_up(x: int, m: int) -> int:
    return (x + m - 1) // m * m


def _softmax_classifier_kernel(x_ref, w_ref, b_ref, o_ref):
    # x_ref: (TB, 784) compute_dtype   w_ref: (784, 128) compute_dtype
    # b_ref: (1, 128) f32              o_ref: (TB, 128) f32
    logits = jnp.dot(x_ref[...], w_ref[...], preferred_element_type=jnp.float32)
    logits = logits + b_ref[...]

    # Numerically-stable log-softmax along the class axis (== torch LogSoftmax(dim=1)).
    m = jnp.max(logits, axis=-1, keepdims=True)
    shifted = logits - m
    lse = jnp.log(jnp.sum(jnp.exp(shifted), axis=-1, keepdims=True))
    o_ref[...] = (shifted - lse).astype(o_ref.dtype)


def softmax_classifier_forward(x_nchw, weights, biases, *,
                               block_b=1024, compute_dtype=jnp.bfloat16):
    """Forward pass of softmaxClassifier.

    x_nchw : (B, 1, 28, 28) float32 (any shape whose trailing dims flatten to 784)
    weights: (784, 62) float32
    biases : (62,) float32
    returns: (B, 62) float32 log-probabilities
    """
    num_inputs, num_outputs = weights.shape
    x2d = x_nchw.reshape(-1, num_inputs)  # same semantics as torch .reshape
    B = x2d.shape[0]

    # --- class-dim padding: 62 -> 128 (lane-dense output, full MXU N) ---
    n_pad = _round_up(num_outputs, _LANES)
    w = weights.astype(compute_dtype)
    if n_pad != num_outputs:
        w = jnp.pad(w, ((0, 0), (0, n_pad - num_outputs)))
    bias = jnp.pad(biases.astype(jnp.float32), (0, n_pad - num_outputs),
                   constant_values=_NEG_BIG).reshape(1, n_pad)

    # --- batch tiling: TB rows per grid step, batch padded to a multiple ---
    tb = min(int(block_b), _round_up(B, 8))
    tb = _round_up(tb, 8)
    b_pad = _round_up(B, tb)

    x2d = x2d.astype(compute_dtype)
    if b_pad != B:
        x2d = jnp.pad(x2d, ((0, b_pad - B), (0, 0)))

    grid = (b_pad // tb,)
    x_bytes = x2d.dtype.itemsize
    o_bytes = jnp.dtype(jnp.float32).itemsize

    # Scoped-VMEM budget: double-buffered x tile + resident W/b + double-buffered
    # out tile, plus headroom for compiler scratch.
    vmem_bytes = (2 * tb * num_inputs * x_bytes
                  + 2 * num_inputs * n_pad * x_bytes
                  + 2 * n_pad * o_bytes
                  + 2 * tb * n_pad * o_bytes
                  + (8 << 20))

    cost = pl.CostEstimate(
        flops=2 * b_pad * num_inputs * n_pad,
        transcendentals=b_pad * n_pad + b_pad,  # exp per logit + log per row
        bytes_accessed=(b_pad * num_inputs * x_bytes
                        + num_inputs * n_pad * x_bytes
                        + n_pad * o_bytes
                        + b_pad * n_pad * o_bytes),
    )

    out = pl.pallas_call(
        _softmax_classifier_kernel,
        out_shape=jax.ShapeDtypeStruct((b_pad, n_pad), jnp.float32),
        grid=grid,
        in_specs=[
            pl.BlockSpec((tb, num_inputs), lambda i: (i, 0)),       # X tile
            pl.BlockSpec((num_inputs, n_pad), lambda i: (0, 0)),    # W (resident)
            pl.BlockSpec((1, n_pad), lambda i: (0, 0)),             # bias (resident)
        ],
        out_specs=pl.BlockSpec((tb, n_pad), lambda i: (i, 0)),
        compiler_params=pltpu.CompilerParams(
            dimension_semantics=("parallel",),
            vmem_limit_bytes=int(vmem_bytes),
        ),
        cost_estimate=cost,
    )(x2d, w, bias)

    # Strip batch padding and the padded (dummy) classes.
    return out[:B, :num_outputs]


if __name__ == "__main__":
    num_inputs, num_outputs, sigma = 784, 62, 0.03
    batch = 16  # small, but exercises >1 grid step with block_b=8

    key = jax.random.PRNGKey(0)
    kx, kw, kb = jax.random.split(key, 3)

    # Deterministic parameter init, mirroring torch.normal(0, sigma, ...).
    weights = sigma * jax.random.normal(kw, (num_inputs, num_outputs), dtype=jnp.float32)
    biases = sigma * jax.random.normal(kb, (num_outputs,), dtype=jnp.float32)

    # Synthetic "EMNIST" batch, NCHW like the torch dataloader would produce.
    x = jax.random.uniform(kx, (batch, 1, 28, 28), dtype=jnp.float32)

    # Plain-JAX reference (exact forward of the PyTorch module).
    ref = jax.nn.log_softmax(x.reshape(-1, num_inputs) @ weights + biases, axis=1)

    # f32 compute path: bit-for-bit semantics check.
    out_f32 = softmax_classifier_forward(x, weights, biases,
                                         block_b=8, compute_dtype=jnp.float32)
    out_f32 = jax.block_until_ready(out_f32)
    assert out_f32.shape == (batch, num_outputs)
    assert jnp.allclose(out_f32, ref, atol=1e-5, rtol=1e-5)

    # Default (bf16 inputs, f32 accumulate) path: bandwidth-optimized, looser tol.
    out_bf16 = softmax_classifier_forward(x, weights, biases, block_b=8)
    out_bf16 = jax.block_until_ready(out_bf16)
    assert out_bf16.shape == (batch, num_outputs)
    assert jnp.allclose(out_bf16, ref, atol=5e-2, rtol=5e-2)

    print("KERNEL_OK")
</pallas_src>

<mosaic_0001>
module attributes {stable_mosaic.version = 11 : i64} {
  func.func @_softmax_classifier_kernel(%arg0: i32, %arg1: memref<8x784xf32, #tpu.memory_space<vmem>>, %arg2: memref<784x128xf32, #tpu.memory_space<vmem>>, %arg3: memref<1x128xf32, #tpu.memory_space<vmem>>, %arg4: memref<8x128xf32, #tpu.memory_space<vmem>>) attributes {dimension_semantics = [#tpu.dimension_semantics<parallel>], iteration_bounds = array<i64: 2>, scalar_prefetch = 0 : i64, scratch_operands = 0 : i64, tpu.core_type = #tpu.core_type<tc>, window_params = [{transform_indices = @transform_0, window_bounds = array<i64: 8, 784>}, {pipeline_mode = #tpu.pipeline_mode<synchronous>, transform_indices = @transform_1, window_bounds = array<i64: 784, 128>}, {pipeline_mode = #tpu.pipeline_mode<synchronous>, transform_indices = @transform_2, window_bounds = array<i64: 1, 128>}, {transform_indices = @transform_3, window_bounds = array<i64: 8, 128>}]} {
    %c0 = arith.constant 0 : index
    %c0_0 = arith.constant 0 : index
    %0 = vector.load %arg1[%c0, %c0_0] : memref<8x784xf32, #tpu.memory_space<vmem>>, vector<8x784xf32>
    %c0_1 = arith.constant 0 : index
    %c0_2 = arith.constant 0 : index
    %1 = vector.load %arg2[%c0_1, %c0_2] : memref<784x128xf32, #tpu.memory_space<vmem>>, vector<784x128xf32>
    %cst = arith.constant dense<0.000000e+00> : vector<8x128xf32>
    %2 = tpu.matmul %0, %1, %cst {dimension_numbers = #tpu.dot_dimension_numbers<[1], [0], [0], [1], [0, 0, 1, 1], [], []>} : vector<8x784xf32>, vector<784x128xf32>, vector<8x128xf32> -> vector<8x128xf32>
    %c0_3 = arith.constant 0 : index
    %c0_4 = arith.constant 0 : index
    %3 = vector.load %arg3[%c0_3, %c0_4] : memref<1x128xf32, #tpu.memory_space<vmem>>, vector<1x128xf32>
    %4 = vector.broadcast %3 : vector<1x128xf32> to vector<8x128xf32>
    %5 = arith.addf %2, %4 : vector<8x128xf32>
    %cst_5 = arith.constant dense<0xFF800000> : vector<8xf32>
    %6 = vector.multi_reduction <maximumf>, %5, %cst_5 [1] : vector<8x128xf32> to vector<8xf32>
    %7 = vector.shape_cast %6 : vector<8xf32> to vector<8x1xf32>
    %8 = vector.broadcast %7 : vector<8x1xf32> to vector<8x128xf32>
    %9 = arith.subf %5, %8 : vector<8x128xf32>
    %10 = math.exp %9 : vector<8x128xf32>
    %cst_6 = arith.constant dense<0.000000e+00> : vector<8xf32>
    %11 = vector.multi_reduction <add>, %10, %cst_6 [1] : vector<8x128xf32> to vector<8xf32>
    %12 = vector.shape_cast %11 : vector<8xf32> to vector<8x1xf32>
    %13 = math.log %12 : vector<8x1xf32>
    %14 = vector.broadcast %13 : vector<8x1xf32> to vector<8x128xf32>
    %15 = arith.subf %9, %14 : vector<8x128xf32>
    %c0_7 = arith.constant 0 : index
    %c0_8 = arith.constant 0 : index
    %16 = vector.load %arg4[%c0_7, %c0_8] : memref<8x128xf32, #tpu.memory_space<vmem>>, vector<8x128xf32>
    tpu.vector_store %arg4[%c0_7, %c0_8], %15 {strides = array<i32>} : memref<8x128xf32, #tpu.memory_space<vmem>>, vector<8x128xf32>,
    return
  }
  func.func @transform_0(%arg0: i32) -> (i32, i32) {
    %c0_i32 = arith.constant 0 : i32
    %c0_i32_0 = arith.constant 0 : i32
    return %arg0, %c0_i32 : i32, i32
  }
  func.func @transform_1(%arg0: i32) -> (i32, i32) {
    %c0_i32 = arith.constant 0 : i32
    %c0_i32_0 = arith.constant 0 : i32
    %c0_i32_1 = arith.constant 0 : i32
    return %c0_i32, %c0_i32_0 : i32, i32
  }
  func.func @transform_2(%arg0: i32) -> (i32, i32) {
    %c0_i32 = arith.constant 0 : i32
    %c0_i32_0 = arith.constant 0 : i32
    %c0_i32_1 = arith.constant 0 : i32
    return %c0_i32, %c0_i32_0 : i32, i32
  }
  func.func @transform_3(%arg0: i32) -> (i32, i32) {
    %c0_i32 = arith.constant 0 : i32
    %c0_i32_0 = arith.constant 0 : i32
    return %arg0, %c0_i32 : i32, i32
  }
}

</mosaic_0001>

<llo_original>
// kernel: tpu_custom_call.1
$region0: #{tpu_custom_call.1}
  #allocation0 [shape = 'u32[]', space=smem, size = 0x4, offset = 0x4, fixed_abs, tag = 'smem constant byte address 0x4 - core index']
  #allocation1 [shape = 'u32[72,128]{1,0:T(1,128)}', space=vmem, size = 0x9000, scoped, tag = 'internal scratch']
  %s0 = inlined_call_operand.hbm [shape: f32[16,784], index: 0, kind: input, shape index: {}]
  %s1 = inlined_call_operand.hbm [shape: f32[784,128], index: 1, kind: input, shape index: {}]
  %s2 = inlined_call_operand.vmem [shape: f32[1,128], index: 2, kind: input, shape index: {}]
  %s3 = inlined_call_operand.hbm [shape: f32[16,128], index: 3, kind: output, shape index: {}]
  %s4 = sld [smem:[#allocation0]]
  $region53: #{tpu_custom_call.1} parent=0
    _
  %s6 = ssub.s32 1, %s4
  %s7 = scalar_select 0, %s6, %s4
  $region1: #{tpu_custom_call.1} parent=0
    #allocation2 [shape = 'u8[57344]{0}', space=vmem, size = 0xe000, scoped, tag = 'input window, operand 0']
    #allocation3 [shape = 's32[2]{0}', space=sflag, size = 0x8, scoped, tag = 'scoped memory for tpu_custom_call.1']
    #allocation4 [shape = 's32[2]{0}', space=sflag, size = 0x8, scoped, tag = 'scoped memory for tpu_custom_call.1']
    #allocation5 [shape = 'u8[401408]{0}', space=vmem, size = 0x62000, scoped, tag = 'input window, operand 1, single buffered']
    #allocation6 [shape = 's32[1]{0}', space=sflag, size = 0x4, scoped, tag = 'scoped memory for tpu_custom_call.1']
    #allocation7 [shape = 'u8[8192]{0}', space=vmem, size = 0x2000, scoped, tag = 'output window, operand 0']
    %8 = vsyncpa [#allocation3], 0
    %s9 = scalar_lea.sflag [#allocation3], 1
    %10 = vsyncpa %s9, 0
    %11 = vsyncpa [#allocation6], 0
    %12 = vsyncpa [#allocation4], 0
    %s13 = scalar_lea.sflag [#allocation4], 1
    %14 = vsyncpa %s13, 0
    loop: start=0, step=1, limit=4
    $region2: #{tpu_custom_call.1} parent=1 // loop_pre_header
      _
    $region3: #{tpu_custom_call.1} parent=1 // loop_header
      %s16 = sphi 0, %s20
      %p17 = scmp.ge.s32.totalorder %s16, 4
      %s26 = sphi 0, %s28
      %s29 = sphi 0, %s26
      %s30 = sphi 0, %s29
      %s46 = sphi 0, %s30
      %s50 = sphi 0, %s50
      %s52 = sphi 0, %s50
      %s53 = sphi 0, %s52
      %s67 = sphi 0, %s53
      %s71 = sphi 0, %s71
      %s73 = sphi 0, %s71
      %s74 = sphi 0, %s73
      %s88 = sphi 0, %s74
      %s94 = sphi 0, %s96
      %s97 = sphi 0, %s94
      %s98 = sphi 0, %s97
      %s114 = sphi 0, %s98
    $region4: #{tpu_custom_call.1} parent=1 // loop_header_branch
      %19 = sbr.rel (%p17) target = $region8
    $region5: #{tpu_custom_call.1} parent=1 // loop_body
      %s21 = ssub.s32 %s16, 1
      %s22 = ssub.s32 %s16, 2
      %s23 = sadd.s32 %s16, 1
      %s24 = ssub.s32 %s16, %s23
      %p25 = scmp.eq.s32.totalorder %s24, 0
      %s27 = sadd.s32 %s26, 1
      %s28 = scalar_select %p25, %s26, %s27
      %p31 = pneg %p25
      %p32 = scmp.eq.s32.totalorder %s16, 1
      %p33 = por %p31, %p32
      %p34 = scmp.ne.s32.totalorder %s26, %s29
      %p35 = scmp.eq.s32.totalorder %s16, 0
      %p36 = por %p34, %p35
      %p37 = scmp.ne.s32.totalorder %s26, %s29
      %p38 = scmp.eq.s32.totalorder %s21, 1
      %p39 = por %p37, %p38
      %p40 = scmp.ne.s32.totalorder %s29, %s30
      %p41 = scmp.eq.s32.totalorder %s21, 0
      %p42 = por %p40, %p41
      %p43 = scmp.ne.s32.totalorder %s29, %s30
      %p44 = scmp.eq.s32.totalorder %s22, 1
      %p45 = por %p43, %p44
      %p47 = scmp.ne.s32.totalorder %s30, %s46
      %p48 = scmp.eq.s32.totalorder %s22, 0
      %p49 = por %p47, %p48
      %s51 = sadd.s32 %s50, 1
      %p54 = scmp.eq.s32.totalorder %s16, 1
      %p55 = scmp.ne.s32.totalorder %s50, %s52
      %p56 = scmp.eq.s32.totalorder %s16, 0
      %p57 = por %p55, %p56
      %p58 = scmp.ne.s32.totalorder %s50, %s52
      %p59 = scmp.eq.s32.totalorder %s21, 1
      %p60 = por %p58, %p59
      %p61 = scmp.ne.s32.totalorder %s52, %s53
      %p62 = scmp.eq.s32.totalorder %s21, 0
      %p63 = por %p61, %p62
      %p64 = scmp.ne.s32.totalorder %s52, %s53
      %p65 = scmp.eq.s32.totalorder %s22, 1
      %p66 = por %p64, %p65
      %p68 = scmp.ne.s32.totalorder %s53, %s67
      %p69 = scmp.eq.s32.totalorder %s22, 0
      %p70 = por %p68, %p69
      %s72 = sadd.s32 %s71, 1
      %p75 = scmp.eq.s32.totalorder %s16, 1
      %p76 = scmp.ne.s32.totalorder %s71, %s73
      %p77 = scmp.eq.s32.totalorder %s16, 0
      %p78 = por %p76, %p77
      %p79 = scmp.ne.s32.totalorder %s71, %s73
      %p80 = scmp.eq.s32.totalorder %s21, 1
      %p81 = por %p79, %p80
      %p82 = scmp.ne.s32.totalorder %s73, %s74
      %p83 = scmp.eq.s32.totalorder %s21, 0
      %p84 = por %p82, %p83
      %p85 = scmp.ne.s32.totalorder %s73, %s74
      %p86 = scmp.eq.s32.totalorder %s22, 1
      %p87 = por %p85, %p86
      %p89 = scmp.ne.s32.totalorder %s74, %s88
      %p90 = scmp.eq.s32.totalorder %s22, 0
      %p91 = por %p89, %p90
      %s92 = ssub.s32 %s16, %s23
      %p93 = scmp.eq.s32.totalorder %s92, 0
      %s95 = sadd.s32 %s94, 1
      %s96 = scalar_select %p93, %s94, %s95
      %p99 = pneg %p93
      %p100 = scmp.eq.s32.totalorder %s16, 1
      %p101 = por %p99, %p100
      %p102 = scmp.ne.s32.totalorder %s94, %s97
      %p103 = scmp.eq.s32.totalorder %s16, 0
      %p104 = por %p102, %p103
      %p105 = scmp.ne.s32.totalorder %s94, %s97
      %p106 = scmp.eq.s32.totalorder %s21, 1
      %p107 = por %p105, %p106
      %p108 = scmp.ne.s32.totalorder %s97, %s98
      %p109 = scmp.eq.s32.totalorder %s21, 0
      %p110 = por %p108, %p109
      %p111 = scmp.ne.s32.totalorder %s97, %s98
      %p112 = scmp.eq.s32.totalorder %s22, 1
      %p113 = por %p111, %p112
      %p115 = scmp.ne.s32.totalorder %s98, %s114
      %p116 = scmp.eq.s32.totalorder %s22, 0
      %p117 = por %p115, %p116
      %p118 = scmp.le.s32.totalorder 1, %s16
      %p119 = scmp.lt.s32.totalorder %s16, 3
      %p120 = pnand %p118, %p119
      %p121 = pneg %p120
      // Predicated region
      $region9: #{tpu_custom_call.1} parent=5 // pred_check
        _
      $region10: #{tpu_custom_call.1} parent=5 // pred_check_branch
        %123 = sbr.rel (%p120) target = $region12
      $region11: #{tpu_custom_call.1} parent=5 // pred_region
        %s124 = ssub.s32 %s16, 1
        // Predicated region
        $region13: #{tpu_custom_call.1} parent=11 // pred_check
          %p125 = pneg %p63
        $region14: #{tpu_custom_call.1} parent=11 // pred_check_branch
          %127 = sbr.rel (%p125) target = $region16
        $region15: #{tpu_custom_call.1} parent=11 // pred_region
          %129 = vsyncadd [#allocation6], 0
          %s130 = sshll.u32 %s1, 4
          %s131 = int_to_ptr.hbm [resolvable:$true] %s130
          %s132 = sshll.u32 [#allocation5], 4
          %s133 = int_to_ptr.vmem [resolvable:$true] %s132
          %138 = dma.hbm_to_vmem [thread:$0]  %s131, 12544, %s133, [#allocation6], 128, 128, 8
        $region16: #{tpu_custom_call.1} parent=11 // pred_fallthru
          _
        // Predicated region
        $region17: #{tpu_custom_call.1} parent=11 // pred_check
          %p139 = pneg %p84
        $region18: #{tpu_custom_call.1} parent=11 // pred_check_branch
          %141 = sbr.rel (%p139) target = $region20
        $region19: #{tpu_custom_call.1} parent=11 // pred_region
          _
        $region20: #{tpu_custom_call.1} parent=11 // pred_fallthru
          _
      $region12: #{tpu_custom_call.1} parent=5 // pred_fallthru
        _
      %p142 = scmp.lt.s32.totalorder %s16, 2
      // Predicated region
      $region21: #{tpu_custom_call.1} parent=5 // pred_check
        %p143 = pneg %p142
      $region22: #{tpu_custom_call.1} parent=5 // pred_check_branch
        %145 = sbr.rel (%p143) target = $region24
      $region23: #{tpu_custom_call.1} parent=5 // pred_region
        // Predicated region
        $region25: #{tpu_custom_call.1} parent=23 // pred_check
          %p146 = pneg %p36
        $region26: #{tpu_custom_call.1} parent=23 // pred_check_branch
          %148 = sbr.rel (%p146) target = $region28
        $region27: #{tpu_custom_call.1} parent=23 // pred_region
          %s149 = sand.u32 %s26, 1
          %s150 = scalar_lea.sflag [#allocation3], %s149
          %s151 = sand.u32 %s26, 1
          %s152 = smul.addr %s151, 56
          %s153 = scalar_lea.vmem [#allocation2], %s152
          %155 = vsyncadd %s150, 0
          %s156 = smul.addr %s16, 7
          %s157 = smul.addr %s156, 8
          %s158 = scalar_lea.hbm %s0, %s157
          %s160 = sshll.u32 %s158, 4
          %s161 = int_to_ptr.hbm [resolvable:$true] %s160
          %s162 = sshll.u32 %s153, 4
          %s163 = int_to_ptr.vmem [resolvable:$true] %s162
          %165 = dma.hbm_to_vmem [thread:$0]  %s161, 896, %s163, %s150
        $region28: #{tpu_custom_call.1} parent=23 // pred_fallthru
          _
      $region24: #{tpu_custom_call.1} parent=5 // pred_fallthru
        _
      %p166 = scmp.le.s32.totalorder 1, %s16
      %p167 = scmp.lt.s32.totalorder %s16, 3
      %p168 = pnand %p166, %p167
      %p169 = pneg %p168
      // Predicated region
      $region29: #{tpu_custom_call.1} parent=5 // pred_check
        _
      $region30: #{tpu_custom_call.1} parent=5 // pred_check_branch
        %171 = sbr.rel (%p168) target = $region32
      $region31: #{tpu_custom_call.1} parent=5 // pred_region
        %s172 = ssub.s32 %s16, 1
        %s173 = sand.u32 %s29, 1
        %s174 = scalar_lea.sflag [#allocation3], %s173
        %s175 = sand.u32 %s29, 1
        %s176 = smul.addr %s175, 56
        %s177 = scalar_lea.vmem [#allocation2], %s176
        // Predicated region
        $region33: #{tpu_custom_call.1} parent=31 // pred_check
          %p178 = pneg %p42
        $region34: #{tpu_custom_call.1} parent=31 // pred_check_branch
          %180 = sbr.rel (%p178) target = $region36
        $region35: #{tpu_custom_call.1} parent=31 // pred_region
          %182 = dma.done %s174, 896
        $region36: #{tpu_custom_call.1} parent=31 // pred_fallthru
          _
        // Predicated region
        $region37: #{tpu_custom_call.1} parent=31 // pred_check
          %p183 = pneg %p63
        $region38: #{tpu_custom_call.1} parent=31 // pred_check_branch
          %185 = sbr.rel (%p183) target = $region40
        $region39: #{tpu_custom_call.1} parent=31 // pred_region
          %187 = dma.done [#allocation6], 12544
        $region40: #{tpu_custom_call.1} parent=31 // pred_fallthru
          _
        %s188 = sand.u32 %s29, 1
        %s189 = scalar_lea.sflag [#allocation3], %s188
        %s190 = sand.u32 %s29, 1
        %s191 = smul.addr %s190, 56
        %s192 = scalar_lea.vmem [#allocation2], %s191
        %p193 = pneg %p42
        %p194 = pneg %p39
        %p195 = pneg %p63
        %p196 = pneg %p60
        %p197 = pneg %p84
        %p198 = pneg %p81
        %p199 = pneg %p110
        %p200 = pneg %p107
        %s201 = sand.u32 %s97, 1
        %s202 = scalar_lea.sflag [#allocation4], %s201
        %s203 = sand.u32 %s97, 1
        %s204 = smul.addr %s203, 8
        %s205 = scalar_lea.vmem [#allocation7], %s204
        %v206 = vld [vmem:[%s177] sm:$0xff]
        %v207 = vld [vmem:[%s177 + $0x8] sm:$0xff]
        %v208 = vld [vmem:[%s177 + $0x10] sm:$0xff]
        %v209 = vld [vmem:[%s177 + $0x18] sm:$0xff]
        %v210 = vld [vmem:[%s177 + $0x20] sm:$0xff]
        %v211 = vld [vmem:[%s177 + $0x28] sm:$0xff]
        %v212 = vld [vmem:[%s177 + $0x30] sm:$0xff]
        %v213 = vld [vmem:[#allocation5] sm:$0xff]
        %v214 = vld [vmem:[#allocation5 + $0x8] sm:$0xff]
        %v215 = vld [vmem:[#allocation5 + $0x10] sm:$0xff]
        %v216 = vld [vmem:[#allocation5 + $0x18] sm:$0xff]
        %v217 = vld [vmem:[#allocation5 + $0x20] sm:$0xff]
        %v218 = vld [vmem:[#allocation5 + $0x28] sm:$0xff]
        %v219 = vld [vmem:[#allocation5 + $0x30] sm:$0xff]
        %v220 = vld [vmem:[#allocation5 + $0x38] sm:$0xff]
        %v221 = vld [vmem:[#allocation5 + $0x40] sm:$0xff]
        %v222 = vld [vmem:[#allocation5 + $0x48] sm:$0xff]
        %v223 = vld [vmem:[#allocation5 + $0x50] sm:$0xff]
        %v224 = vld [vmem:[#allocation5 + $0x58] sm:$0xff]
        %v225 = vld [vmem:[#allocation5 + $0x60] sm:$0xff]
        %v226 = vld [vmem:[#allocation5 + $0x68] sm:$0xff]
        %v227 = vld [vmem:[#allocation5 + $0x70] sm:$0xff]
        %v228 = vld [vmem:[#allocation5 + $0x78] sm:$0xff]
        %v229 = vld [vmem:[#allocation5 + $0x80] sm:$0xff]
        %v230 = vld [vmem:[#allocation5 + $0x88] sm:$0xff]
        %v231 = vld [vmem:[#allocation5 + $0x90] sm:$0xff]
        %v232 = vld [vmem:[#allocation5 + $0x98] sm:$0xff]
        %v233 = vld [vmem:[#allocation5 + $0xa0] sm:$0xff]
        %v234 = vld [vmem:[#allocation5 + $0xa8] sm:$0xff]
        %v235 = vld [vmem:[#allocation5 + $0xb0] sm:$0xff]
        %v236 = vld [vmem:[#allocation5 + $0xb8] sm:$0xff]
        %v237 = vld [vmem:[#allocation5 + $0xc0] sm:$0xff]
        %v238 = vld [vmem:[#allocation5 + $0xc8] sm:$0xff]
        %v239 = vld [vmem:[#allocation5 + $0xd0] sm:$0xff]
        %v240 = vld [vmem:[#allocation5 + $0xd8] sm:$0xff]
        %v241 = vld [vmem:[#allocation5 + $0xe0] sm:$0xff]
        %v242 = vld [vmem:[#allocation5 + $0xe8] sm:$0xff]
        %v243 = vld [vmem:[#allocation5 + $0xf0] sm:$0xff]
        %v244 = vld [vmem:[#allocation5 + $0xf8] sm:$0xff]
        %v245 = vld [vmem:[#allocation5 + $0x100] sm:$0xff]
        %v246 = vld [vmem:[#allocation5 + $0x108] sm:$0xff]
        %v247 = vld [vmem:[#allocation5 + $0x110] sm:$0xff]
        %v248 = vld [vmem:[#allocation5 + $0x118] sm:$0xff]
        %v249 = vld [vmem:[#allocation5 + $0x120] sm:$0xff]
        %v250 = vld [vmem:[#allocation5 + $0x128] sm:$0xff]
        %v251 = vld [vmem:[#allocation5 + $0x130] sm:$0xff]
        %v252 = vld [vmem:[#allocation5 + $0x138] sm:$0xff]
        %v253 = vld [vmem:[#allocation5 + $0x140] sm:$0xff]
        %v254 = vld [vmem:[#allocation5 + $0x148] sm:$0xff]
        %v255 = vld [vmem:[#allocation5 + $0x150] sm:$0xff]
        %v256 = vld [vmem:[#allocation5 + $0x158] sm:$0xff]
        %v257 = vld [vmem:[#allocation5 + $0x160] sm:$0xff]
        %v258 = vld [vmem:[#allocation5 + $0x168] sm:$0xff]
        %v259 = vld [vmem:[#allocation5 + $0x170] sm:$0xff]
        %v260 = vld [vmem:[#allocation5 + $0x178] sm:$0xff]
        %v261 = vld [vmem:[#allocation5 + $0x180] sm:$0xff]
        %v262 = vld [vmem:[#allocation5 + $0x188] sm:$0xff]
        %v263 = vld [vmem:[#allocation5 + $0x190] sm:$0xff]
        %v264 = vld [vmem:[#allocation5 + $0x198] sm:$0xff]
        %v265 = vld [vmem:[#allocation5 + $0x1a0] sm:$0xff]
        %v266 = vld [vmem:[#allocation5 + $0x1a8] sm:$0xff]
        %v267 = vld [vmem:[#allocation5 + $0x1b0] sm:$0xff]
        %v268 = vld [vmem:[#allocation5 + $0x1b8] sm:$0xff]
        %v269 = vld [vmem:[#allocation5 + $0x1c0] sm:$0xff]
        %v270 = vld [vmem:[#allocation5 + $0x1c8] sm:$0xff]
        %v271 = vld [vmem:[#allocation5 + $0x1d0] sm:$0xff]
        %v272 = vld [vmem:[#allocation5 + $0x1d8] sm:$0xff]
        %v273 = vld [vmem:[#allocation5 + $0x1e0] sm:$0xff]
        %v274 = vld [vmem:[#allocation5 + $0x1e8] sm:$0xff]
        %v275 = vld [vmem:[#allocation5 + $0x1f0] sm:$0xff]
        %v276 = vld [vmem:[#allocation5 + $0x1f8] sm:$0xff]
        %v277 = vld [vmem:[#allocation5 + $0x200] sm:$0xff]
        %v278 = vld [vmem:[#allocation5 + $0x208] sm:$0xff]
        %v279 = vld [vmem:[#allocation5 + $0x210] sm:$0xff]
        %v280 = vld [vmem:[#allocation5 + $0x218] sm:$0xff]
        %v281 = vld [vmem:[#allocation5 + $0x220] sm:$0xff]
        %v282 = vld [vmem:[#allocation5 + $0x228] sm:$0xff]
        %v283 = vld [vmem:[#allocation5 + $0x230] sm:$0xff]
        %v284 = vld [vmem:[#allocation5 + $0x238] sm:$0xff]
        %v285 = vld [vmem:[#allocation5 + $0x240] sm:$0xff]
        %v286 = vld [vmem:[#allocation5 + $0x248] sm:$0xff]
        %v287 = vld [vmem:[#allocation5 + $0x250] sm:$0xff]
        %v288 = vld [vmem:[#allocation5 + $0x258] sm:$0xff]
        %v289 = vld [vmem:[#allocation5 + $0x260] sm:$0xff]
        %v290 = vld [vmem:[#allocation5 + $0x268] sm:$0xff]
        %v291 = vld [vmem:[#allocation5 + $0x270] sm:$0xff]
        %v292 = vld [vmem:[#allocation5 + $0x278] sm:$0xff]
        %v293 = vld [vmem:[#allocation5 + $0x280] sm:$0xff]
        %v294 = vld [vmem:[#allocation5 + $0x288] sm:$0xff]
        %v295 = vld [vmem:[#allocation5 + $0x290] sm:$0xff]
        %v296 = vld [vmem:[#allocation5 + $0x298] sm:$0xff]
        %v297 = vld [vmem:[#allocation5 + $0x2a0] sm:$0xff]
        %v298 = vld [vmem:[#allocation5 + $0x2a8] sm:$0xff]
        %v299 = vld [vmem:[#allocation5 + $0x2b0] sm:$0xff]
        %v300 = vld [vmem:[#allocation5 + $0x2b8] sm:$0xff]
        %v301 = vld [vmem:[#allocation5 + $0x2c0] sm:$0xff]
        %v302 = vld [vmem:[#allocation5 + $0x2c8] sm:$0xff]
        %v303 = vld [vmem:[#allocation5 + $0x2d0] sm:$0xff]
        %v304 = vld [vmem:[#allocation5 + $0x2d8] sm:$0xff]
        %v305 = vld [vmem:[#allocation5 + $0x2e0] sm:$0xff]
        %v306 = vld [vmem:[#allocation5 + $0x2e8] sm:$0xff]
        %v307 = vld [vmem:[#allocation5 + $0x2f0] sm:$0xff]
        %v308 = vld [vmem:[#allocation5 + $0x2f8] sm:$0xff]
        %v309 = vld [vmem:[#allocation5 + $0x300] sm:$0xff]
        %v310 = vld [vmem:[#allocation5 + $0x308] sm:$0xff]
        %v311 = vld [vmem:[%s2] sm:$0x1]
        %v313 = vperm.slane %v311, 0
        %vm315 = vcmask 130048
        %v317 = vsel %vm315, %v212, 0
        %319 = vmatpush.msra.mxu0 %v228
        %320 = vmatpush.msra.mxu0 %v227
        %321 = vmatpush.msra.mxu0 %v226
        %322 = vmatpush.msra.mxu0 %v225
        %323 = vmatpush.msra.mxu0 %v224
        %324 = vmatpush.msra.mxu0 %v223
        %325 = vmatpush.msra.mxu0 %v222
        %326 = vmatpush.msra.mxu0 %v221
        %327 = vmatpush.msra.mxu0 %v220
        %328 = vmatpush.msra.mxu0 %v219
        %329 = vmatpush.msra.mxu0 %v218
        %330 = vmatpush.msra.mxu0 %v217
        %331 = vmatpush.msra.mxu0 %v216
        %332 = vmatpush.msra.mxu0 %v215
        %333 = vmatpush.msra.mxu0 %v214
        %334 = vmatpush.msra.mxu0 %v213
        %335 = vmatmul.f32.gmra.mxu0 %v206
        %v336 = vpop.f32.mrf.mxu0
        %v337 = vadd.f32 %v313, %v336
        %338 = vdwg.mxu0
        %339 = vmatpush.msra.mxu0 %v244
        %340 = vmatpush.msra.mxu0 %v243
        %341 = vmatpush.msra.mxu0 %v242
        %342 = vmatpush.msra.mxu0 %v241
        %343 = vmatpush.msra.mxu0 %v240
        %344 = vmatpush.msra.mxu0 %v239
        %345 = vmatpush.msra.mxu0 %v238
        %346 = vmatpush.msra.mxu0 %v237
        %347 = vmatpush.msra.mxu0 %v236
        %348 = vmatpush.msra.mxu0 %v235
        %349 = vmatpush.msra.mxu0 %v234
        %350 = vmatpush.msra.mxu0 %v233
        %351 = vmatpush.msra.mxu0 %v232
        %352 = vmatpush.msra.mxu0 %v231
        %353 = vmatpush.msra.mxu0 %v230
        %354 = vmatpush.msra.mxu0 %v229
        %355 = vmatmul.f32.gmra.mxu0 %v207
        %v356 = vpop.f32.mrf.mxu0
        %v357 = vadd.f32 %v337, %v356
        %358 = vdwg.mxu0
        %359 = vmatpush.msra.mxu0 %v260
        %360 = vmatpush.msra.mxu0 %v259
        %361 = vmatpush.msra.mxu0 %v258
        %362 = vmatpush.msra.mxu0 %v257
        %363 = vmatpush.msra.mxu0 %v256
        %364 = vmatpush.msra.mxu0 %v255
        %365 = vmatpush.msra.mxu0 %v254
        %366 = vmatpush.msra.mxu0 %v253
        %367 = vmatpush.msra.mxu0 %v252
        %368 = vmatpush.msra.mxu0 %v251
        %369 = vmatpush.msra.mxu0 %v250
        %370 = vmatpush.msra.mxu0 %v249
        %371 = vmatpush.msra.mxu0 %v248
        %372 = vmatpush.msra.mxu0 %v247
        %373 = vmatpush.msra.mxu0 %v246
        %374 = vmatpush.msra.mxu0 %v245
        %375 = vmatmul.f32.gmra.mxu0 %v208
        %v376 = vpop.f32.mrf.mxu0
        %v377 = vadd.f32 %v357, %v376
        %378 = vdwg.mxu0
        %379 = vmatpush.msra.mxu0 %v276
        %380 = vmatpush.msra.mxu0 %v275
        %381 = vmatpush.msra.mxu0 %v274
        %382 = vmatpush.msra.mxu0 %v273
        %383 = vmatpush.msra.mxu0 %v272
        %384 = vmatpush.msra.mxu0 %v271
        %385 = vmatpush.msra.mxu0 %v270
        %386 = vmatpush.msra.mxu0 %v269
        %387 = vmatpush.msra.mxu0 %v268
        %388 = vmatpush.msra.mxu0 %v267
        %389 = vmatpush.msra.mxu0 %v266
        %390 = vmatpush.msra.mxu0 %v265
        %391 = vmatpush.msra.mxu0 %v264
        %392 = vmatpush.msra.mxu0 %v263
        %393 = vmatpush.msra.mxu0 %v262
        %394 = vmatpush.msra.mxu0 %v261
        %395 = vmatmul.f32.gmra.mxu0 %v209
        %v396 = vpop.f32.mrf.mxu0
        %v397 = vadd.f32 %v377, %v396
        %398 = vdwg.mxu0
        %399 = vmatpush.msra.mxu0 %v292
        %400 = vmatpush.msra.mxu0 %v291
        %401 = vmatpush.msra.mxu0 %v290
        %402 = vmatpush.msra.mxu0 %v289
        %403 = vmatpush.msra.mxu0 %v288
        %404 = vmatpush.msra.mxu0 %v287
        %405 = vmatpush.msra.mxu0 %v286
        %406 = vmatpush.msra.mxu0 %v285
        %407 = vmatpush.msra.mxu0 %v284
        %408 = vmatpush.msra.mxu0 %v283
        %409 = vmatpush.msra.mxu0 %v282
        %410 = vmatpush.msra.mxu0 %v281
        %411 = vmatpush.msra.mxu0 %v280
        %412 = vmatpush.msra.mxu0 %v279
        %413 = vmatpush.msra.mxu0 %v278
        %414 = vmatpush.msra.mxu0 %v277
        %415 = vmatmul.f32.gmra.mxu0 %v210
        %v416 = vpop.f32.mrf.mxu0
        %v417 = vadd.f32 %v397, %v416
        %418 = vdwg.mxu0
        %419 = vmatpush.msra.mxu0 %v308
        %420 = vmatpush.msra.mxu0 %v307
        %421 = vmatpush.msra.mxu0 %v306
        %422 = vmatpush.msra.mxu0 %v305
        %423 = vmatpush.msra.mxu0 %v304
        %424 = vmatpush.msra.mxu0 %v303
        %425 = vmatpush.msra.mxu0 %v302
        %426 = vmatpush.msra.mxu0 %v301
        %427 = vmatpush.msra.mxu0 %v300
        %428 = vmatpush.msra.mxu0 %v299
        %429 = vmatpush.msra.mxu0 %v298
        %430 = vmatpush.msra.mxu0 %v297
        %431 = vmatpush.msra.mxu0 %v296
        %432 = vmatpush.msra.mxu0 %v295
        %433 = vmatpush.msra.mxu0 %v294
        %434 = vmatpush.msra.mxu0 %v293
        %435 = vmatmul.f32.gmra.mxu0 %v211
        %v436 = vpop.f32.mrf.mxu0
        %v437 = vadd.f32 %v417, %v436
        %438 = vdwg.mxu0
        %439 = vmatpush.msra.mxu0 0.0
        %440 = vmatpush.msra.mxu0 0.0
        %441 = vmatpush.msra.mxu0 0.0
        %442 = vmatpush.msra.mxu0 0.0
        %443 = vmatpush.msra.mxu0 0.0
        %444 = vmatpush.msra.mxu0 0.0
        %445 = vmatpush.msra.mxu0 0.0
        %446 = vmatpush.msra.mxu0 0.0
        %447 = vmatpush.msra.mxu0 0.0
        %448 = vmatpush.msra.mxu0 0.0
        %449 = vmatpush.msra.mxu0 0.0
        %450 = vmatpush.msra.mxu0 0.0
        %451 = vmatpush.msra.mxu0 0.0
        %452 = vmatpush.msra.mxu0 0.0
        %453 = vmatpush.msra.mxu0 %v310
        %454 = vmatpush.msra.mxu0 %v309
        %455 = vmatmul.f32.gmra.mxu0 %v317
        %v456 = vpop.f32.mrf.mxu0
        %v457 = vadd.f32 %v437, %v456
        %458 = vdwg.mxu0
        %459 = vmax.xlane.f32.xlu0 %v457
        %v460 = vpop.xlane.xlu0 %459
        %v461 = vsub.f32 %v457, %v460
        %v462 = vmul.f32 %v461, 1.442695
        %v463 = vpow.pop %v462
        %464 = vadd.xlane.f32.xlu0 %v463
        %v465 = vpop.xlane.xlu0 %464
        %v466 = vlog2.pop %v465
        %v467 = vmul.f32 %v466, 0.6931472
        %v468 = vsub.f32 %v461, %v467
        %469 = vst [vmem:[%s205] sm:$0xff] %v468
        %s470 = sand.u32 %s97, 1
        %s471 = scalar_lea.sflag [#allocation4], %s470
        %s472 = sand.u32 %s97, 1
        %s473 = smul.addr %s472, 8
        %s474 = scalar_lea.vmem [#allocation7], %s473
        // Predicated region
        $region41: #{tpu_custom_call.1} parent=31 // pred_check
          %p475 = pneg %p107
        $region42: #{tpu_custom_call.1} parent=31 // pred_check_branch
          %477 = sbr.rel (%p475) target = $region44
        $region43: #{tpu_custom_call.1} parent=31 // pred_region
          %479 = vsyncadd %s471, 0
          %s480 = smul.addr %s21, 8
          %s481 = scalar_lea.hbm %s3, %s480
          %s483 = sshll.u32 %s474, 4
          %s484 = int_to_ptr.vmem [resolvable:$true] %s483
          %s485 = sshll.u32 %s481, 4
          %s486 = int_to_ptr.hbm [resolvable:$true] %s485
          %488 = dma.vmem_to_hbm [thread:$0]  %s484, 128, %s486, %s471
        $region44: #{tpu_custom_call.1} parent=31 // pred_fallthru
          _
      $region32: #{tpu_custom_call.1} parent=5 // pred_fallthru
        _
      %p489 = scmp.le.s32.totalorder 2, %s16
      // Predicated region
      $region45: #{tpu_custom_call.1} parent=5 // pred_check
        %p490 = pneg %p489
      $region46: #{tpu_custom_call.1} parent=5 // pred_check_branch
        %492 = sbr.rel (%p490) target = $region48
      $region47: #{tpu_custom_call.1} parent=5 // pred_region
        %s493 = ssub.s32 %s16, 2
        // Predicated region
        $region49: #{tpu_custom_call.1} parent=47 // pred_check
          %p494 = pneg %p113
        $region50: #{tpu_custom_call.1} parent=47 // pred_check_branch
          %496 = sbr.rel (%p494) target = $region52
        $region51: #{tpu_custom_call.1} parent=47 // pred_region
          %s497 = sand.u32 %s98, 1
          %s498 = scalar_lea.sflag [#allocation4], %s497
          %s499 = sand.u32 %s98, 1
          %s500 = smul.addr %s499, 8
          %s501 = scalar_lea.vmem [#allocation7], %s500
          %503 = dma.done %s498, 128
        $region52: #{tpu_custom_call.1} parent=47 // pred_fallthru
          _
      $region48: #{tpu_custom_call.1} parent=5 // pred_fallthru
        _
    $region6: #{tpu_custom_call.1} parent=1 // loop_footer
      %s20 = sadd.s32 1, %s16
    $region7: #{tpu_custom_call.1} parent=1 // loop_footer_branch
      %15 = sbr.rel target = $region3
    $region8: #{tpu_custom_call.1} parent=1 // loop_exit
      _
    %504 = vsyncpa [#allocation3], 1
    %s505 = scalar_lea.sflag [#allocation3], 1
    %506 = vsyncpa %s505, 1
    %507 = vsyncpa [#allocation6], 1
    %508 = vsyncpa [#allocation4], 1
    %s509 = scalar_lea.sflag [#allocation4], 1
    %510 = vsyncpa %s509, 1

</llo_original>
